<compile_context>
chip_gen: v7x
topology: tpu7x:2x2x1
jax: 0.10.0
libtpu: 0.0.40
codegen_flags: <defaults>
</compile_context>

<pallas_src>
import functools

import jax
import jax.numpy as jnp
from jax import lax
from jax.experimental import pallas as pl
from jax.experimental.pallas import tpu as pltpu


def _round_up(x, m):
    return ((x + m - 1) // m) * m


def _vmem_cap_bytes():
    """Generation-aware VMEM request ceiling (physical capacity - headroom)."""
    try:
        cap = int(pltpu.get_tpu_info().vmem_capacity_bytes)
        return max(cap - (16 << 20), 32 << 20)   # v7x: ~48 MiB, v5e/v6e: ~112 MiB
    except Exception:
        return 48 << 20                          # conservative: safe on every gen


def _pick_te(e_pad):
    """Largest E-tile <= 512 dividing E_pad, with >= 2 grid steps whenever
    E_pad >= 256 so the single parallel grid axis keeps both v7x TCs busy."""
    k = e_pad // 128
    max_j = min(4, k if k == 1 else k // 2)
    j = max(jj for jj in range(1, max_j + 1) if k % jj == 0)
    return 128 * j


def _da_kernel(da_ref, emb_ref, out_ref, *, layers, unroll):
    """x_{i+1} = DA @ x_i; out = sum_i x_i, for one (N_pad, TE) column tile."""
    cd = da_ref.dtype                       # MXU operand dtype (bf16 or f32)
    da = da_ref[...]
    x0 = emb_ref[...].astype(jnp.float32)   # f32 accumulation throughout

    def body(_, carry):
        cur, acc = carry
        nxt = jnp.dot(da, cur.astype(cd), preferred_element_type=jnp.float32)
        return nxt, acc + nxt

    _, acc = lax.fori_loop(0, layers, body, (x0, x0), unroll=unroll)
    out_ref[...] = acc                      # single lane-dense store per tile


def _factored_kernel(d_ref, a_ref, emb_ref, out_ref, *, layers, unroll):
    """x_{i+1} = D @ (A @ x_i) — DA never materialized (used when M << N)."""
    cd = d_ref.dtype
    d = d_ref[...]
    a = a_ref[...]
    x0 = emb_ref[...].astype(jnp.float32)

    def body(_, carry):
        cur, acc = carry
        ax = jnp.dot(a, cur.astype(cd), preferred_element_type=jnp.float32)
        nxt = jnp.dot(d, ax.astype(cd), preferred_element_type=jnp.float32)
        return nxt, acc + nxt

    _, acc = lax.fori_loop(0, layers, body, (x0, x0), unroll=unroll)
    out_ref[...] = acc


def group_conv(D, A, embedding, *, layers, compute_dtype=jnp.bfloat16):
    """Pallas implementation of GroupConv.forward(embedding, D, A)."""
    N, M = D.shape
    M2, N2 = A.shape
    assert M == M2 and N == N2, "D @ A must be square (N, N)"
    Ne, E = embedding.shape
    assert Ne == N

    # --- Pad to MXU-friendly shapes (zero padding is mathematically inert). ---
    N_pad = _round_up(max(N, 128), 128)
    M_pad = _round_up(max(M, 128), 128)
    E_pad = _round_up(max(E, 128), 128)
    TE = _pick_te(E_pad)
    grid = (E_pad // TE,)

    def pad2(x, r, c):
        pr, pc = r - x.shape[0], c - x.shape[1]
        return jnp.pad(x, ((0, pr), (0, pc))) if (pr or pc) else x

    itemsize = jnp.dtype(compute_dtype).itemsize
    # Embedding travels HBM->VMEM already in compute dtype (halves DMA for bf16).
    Ep = pad2(embedding, N_pad, E_pad).astype(compute_dtype)

    # Precompute DA once (f32 accumulate, XLA matmul) when M >= ~N/2; keep the
    # factored D @ (A @ x) kernel only when M << N.
    use_da = 2 * M_pad >= N_pad
    if use_da:
        DA = jnp.dot(D.astype(jnp.float32), A.astype(jnp.float32),
                     preferred_element_type=jnp.float32)
        weights = (pad2(DA, N_pad, N_pad).astype(compute_dtype),)
        w_shapes = ((N_pad, N_pad),)
        flops = 2 * layers * N_pad * N_pad * E_pad
        w_bytes = N_pad * N_pad * itemsize
        kernel_fn = _da_kernel
    else:
        weights = (pad2(D, N_pad, M_pad).astype(compute_dtype),
                   pad2(A, M_pad, N_pad).astype(compute_dtype))
        w_shapes = ((N_pad, M_pad), (M_pad, N_pad))
        flops = 4 * layers * N_pad * M_pad * E_pad
        w_bytes = 2 * N_pad * M_pad * itemsize
        kernel_fn = _factored_kernel

    unroll = max(1, layers) if layers <= 8 else 4
    kernel = functools.partial(kernel_fn, layers=layers, unroll=unroll)

    cost = pl.CostEstimate(
        flops=flops,
        transcendentals=0,
        bytes_accessed=w_bytes + N_pad * E_pad * itemsize + N_pad * E_pad * 4,
    )
    vmem_cap = _vmem_cap_bytes()

    def run(weight_single_buffered):
        wb = 1 if weight_single_buffered else 2
        need = (wb * w_bytes                     # resident weight(s)
                + 2 * N_pad * TE * itemsize      # double-buffered emb tile
                + 2 * N_pad * TE * 4             # double-buffered out tile
                + (4 << 20))                     # Mosaic scratch headroom
        # TODO(synk): graphs whose weights exceed vmem_cap need a streamed path
        # (weights left in HBM via memory_space=pl.ANY + emit_pipeline) instead
        # of clamping the request.
        vmem_limit = int(min(max(need, 8 << 20), vmem_cap))

        def w_spec(shape):
            idx = lambda e: (0, 0)               # grid-invariant -> stays resident
            if weight_single_buffered:
                return pl.BlockSpec(shape, idx, pipeline_mode=pl.Buffered(1))
            return pl.BlockSpec(shape, idx)

        in_specs = [w_spec(s) for s in w_shapes] + [
            pl.BlockSpec((N_pad, TE), lambda e: (0, e)),     # embedding E-tile
        ]
        return pl.pallas_call(
            kernel,
            out_shape=jax.ShapeDtypeStruct((N_pad, E_pad), jnp.float32),
            grid=grid,
            in_specs=in_specs,
            out_specs=pl.BlockSpec((N_pad, TE), lambda e: (0, e)),
            compiler_params=pltpu.CompilerParams(
                dimension_semantics=("parallel",),
                vmem_limit_bytes=vmem_limit,
            ),
            cost_estimate=cost,
        )(*weights, Ep)

    # Grid-invariant weights only need a single VMEM buffer; fall back to the
    # default double-buffered pipeline if this build rejects Buffered(1).
    try:
        out_pad = jax.block_until_ready(run(hasattr(pl, "Buffered")))
    except Exception:
        out_pad = run(False)

    return out_pad[:N, :E]


def group_conv_ref(D, A, embedding, *, layers):
    """Pure-JAX reference mirroring the PyTorch module."""
    DA = D.astype(jnp.float32) @ A.astype(jnp.float32)
    cur = embedding.astype(jnp.float32)
    acc = cur
    for _ in range(layers):
        cur = DA @ cur
        acc = acc + cur
    return acc


if __name__ == "__main__":
    key = jax.random.PRNGKey(0)
    k1, k2, k3, k4, k5, k6 = jax.random.split(key, 6)

    # --- Case 1: square graph (DA-precompute path): N = M = 16, E = 32. ------
    N, M, E, LAYERS = 16, 16, 32, 3
    # Scale D/A down so repeated propagation stays well-conditioned.
    D = jax.random.normal(k1, (N, M), dtype=jnp.float32) * 0.1
    A = jax.random.normal(k2, (M, N), dtype=jnp.float32) * 0.1
    emb = jax.random.normal(k3, (N, E), dtype=jnp.float32)
    ref = group_conv_ref(D, A, emb, layers=LAYERS)

    out_f32 = jax.block_until_ready(
        group_conv(D, A, emb, layers=LAYERS, compute_dtype=jnp.float32))
    assert out_f32.shape == (N, E) and out_f32.dtype == jnp.float32
    assert jnp.allclose(out_f32, ref, atol=1e-4, rtol=1e-4), "f32 DA mismatch"

    out_bf16 = jax.block_until_ready(group_conv(D, A, emb, layers=LAYERS))
    assert out_bf16.shape == (N, E) and out_bf16.dtype == jnp.float32
    assert jnp.allclose(out_bf16, ref, atol=5e-2, rtol=5e-2), "bf16 DA mismatch"

    # Deep propagation (layers > 8) exercises the partially-unrolled loop path.
    ref_deep = group_conv_ref(D, A, emb, layers=12)
    out_deep = jax.block_until_ready(group_conv(D, A, emb, layers=12))
    assert jnp.allclose(out_deep, ref_deep, atol=5e-2, rtol=5e-2), "deep mismatch"

    # --- Case 2: wide rectangular factorization (M << N -> factored path). ---
    N2_, M2_, E2_, L2_ = 300, 40, 200, 4
    D2 = jax.random.normal(k4, (N2_, M2_), dtype=jnp.float32) * 0.05
    A2 = jax.random.normal(k5, (M2_, N2_), dtype=jnp.float32) * 0.05
    emb2 = jax.random.normal(k6, (N2_, E2_), dtype=jnp.float32)
    ref2 = group_conv_ref(D2, A2, emb2, layers=L2_)
    out2 = jax.block_until_ready(
        group_conv(D2, A2, emb2, layers=L2_, compute_dtype=jnp.float32))
    assert out2.shape == (N2_, E2_)
    assert jnp.allclose(out2, ref2, atol=1e-3, rtol=1e-3), "factored mismatch"

    print("KERNEL_OK")
</pallas_src>

<mosaic_0001>
module attributes {stable_mosaic.version = 11 : i64} {
  func.func @_da_kernel(%arg0: i32, %arg1: memref<128x128xf32, #tpu.memory_space<vmem>>, %arg2: memref<128x128xf32, #tpu.memory_space<vmem>>, %arg3: memref<128x128xf32, #tpu.memory_space<vmem>>) attributes {dimension_semantics = [#tpu.dimension_semantics<parallel>], iteration_bounds = array<i64: 1>, scalar_prefetch = 0 : i64, scratch_operands = 0 : i64, tpu.core_type = #tpu.core_type<tc>, window_params = [{pipeline_mode = #tpu.pipeline_mode<synchronous>, transform_indices = @transform_0, window_bounds = array<i64: 128, 128>}, {transform_indices = @transform_1, window_bounds = array<i64: 128, 128>}, {transform_indices = @transform_2, window_bounds = array<i64: 128, 128>}]} {
    %c0 = arith.constant 0 : index
    %c0_0 = arith.constant 0 : index
    %0 = vector.load %arg1[%c0, %c0_0] : memref<128x128xf32, #tpu.memory_space<vmem>>, vector<128x128xf32>
    %c0_1 = arith.constant 0 : index
    %c0_2 = arith.constant 0 : index
    %1 = vector.load %arg2[%c0_1, %c0_2] : memref<128x128xf32, #tpu.memory_space<vmem>>, vector<128x128xf32>
    %c0_i32 = arith.constant 0 : i32
    %cst = arith.constant dense<0.000000e+00> : vector<128x128xf32>
    %2 = tpu.matmul %0, %1, %cst {dimension_numbers = #tpu.dot_dimension_numbers<[1], [0], [0], [1], [0, 0, 1, 1], [], []>} : vector<128x128xf32>, vector<128x128xf32>, vector<128x128xf32> -> vector<128x128xf32>
    %3 = arith.addf %1, %2 : vector<128x128xf32>
    %c1_i32 = arith.constant 1 : i32
    %cst_3 = arith.constant dense<0.000000e+00> : vector<128x128xf32>
    %4 = tpu.matmul %0, %2, %cst_3 {dimension_numbers = #tpu.dot_dimension_numbers<[1], [0], [0], [1], [0, 0, 1, 1], [], []>} : vector<128x128xf32>, vector<128x128xf32>, vector<128x128xf32> -> vector<128x128xf32>
    %5 = arith.addf %3, %4 : vector<128x128xf32>
    %c2_i32 = arith.constant 2 : i32
    %cst_4 = arith.constant dense<0.000000e+00> : vector<128x128xf32>
    %6 = tpu.matmul %0, %4, %cst_4 {dimension_numbers = #tpu.dot_dimension_numbers<[1], [0], [0], [1], [0, 0, 1, 1], [], []>} : vector<128x128xf32>, vector<128x128xf32>, vector<128x128xf32> -> vector<128x128xf32>
    %7 = arith.addf %5, %6 : vector<128x128xf32>
    %c0_5 = arith.constant 0 : index
    %c0_6 = arith.constant 0 : index
    %8 = vector.load %arg3[%c0_5, %c0_6] : memref<128x128xf32, #tpu.memory_space<vmem>>, vector<128x128xf32>
    tpu.vector_store %arg3[%c0_5, %c0_6], %7 {strides = array<i32>} : memref<128x128xf32, #tpu.memory_space<vmem>>, vector<128x128xf32>,
    return
  }
  func.func @transform_0(%arg0: i32) -> (i32, i32) {
    %c0_i32 = arith.constant 0 : i32
    %c0_i32_0 = arith.constant 0 : i32
    %c0_i32_1 = arith.constant 0 : i32
    return %c0_i32, %c0_i32_0 : i32, i32
  }
  func.func @transform_1(%arg0: i32) -> (i32, i32) {
    %c0_i32 = arith.constant 0 : i32
    %c0_i32_0 = arith.constant 0 : i32
    return %c0_i32, %arg0 : i32, i32
  }
  func.func @transform_2(%arg0: i32) -> (i32, i32) {
    %c0_i32 = arith.constant 0 : i32
    %c0_i32_0 = arith.constant 0 : i32
    return %c0_i32, %arg0 : i32, i32
  }
}

module attributes {stable_mosaic.version = 11 : i64} {
  func.func @_da_kernel(%arg0: i32, %arg1: memref<128x128xf32, #tpu.memory_space<vmem>>, %arg2: memref<128x128xf32, #tpu.memory_space<vmem>>, %arg3: memref<128x128xf32, #tpu.memory_space<vmem>>) attributes {dimension_semantics = [#tpu.dimension_semantics<parallel>], iteration_bounds = array<i64: 1>, scalar_prefetch = 0 : i64, scratch_operands = 0 : i64, tpu.core_type = #tpu.core_type<tc>, window_params = [{pipeline_mode = #tpu.pipeline_mode<synchronous>, transform_indices = @transform_0, window_bounds = array<i64: 128, 128>}, {transform_indices = @transform_1, window_bounds = array<i64: 128, 128>}, {transform_indices = @transform_2, window_bounds = array<i64: 128, 128>}]} {
    %c0 = arith.constant 0 : index
    %c0_0 = arith.constant 0 : index
    %0 = vector.load %arg1[%c0, %c0_0] : memref<128x128xf32, #tpu.memory_space<vmem>>, vector<128x128xf32>
    %c0_1 = arith.constant 0 : index
    %c0_2 = arith.constant 0 : index
    %1 = vector.load %arg2[%c0_1, %c0_2] : memref<128x128xf32, #tpu.memory_space<vmem>>, vector<128x128xf32>
    %c0_i32 = arith.constant 0 : i32
    %cst = arith.constant dense<0.000000e+00> : vector<128x128xf32>
    %2 = tpu.matmul %0, %1, %cst {dimension_numbers = #tpu.dot_dimension_numbers<[1], [0], [0], [1], [0, 0, 1, 1], [], []>} : vector<128x128xf32>, vector<128x128xf32>, vector<128x128xf32> -> vector<128x128xf32>
    %3 = arith.addf %1, %2 : vector<128x128xf32>
    %c1_i32 = arith.constant 1 : i32
    %cst_3 = arith.constant dense<0.000000e+00> : vector<128x128xf32>
    %4 = tpu.matmul %0, %2, %cst_3 {dimension_numbers = #tpu.dot_dimension_numbers<[1], [0], [0], [1], [0, 0, 1, 1], [], []>} : vector<128x128xf32>, vector<128x128xf32>, vector<128x128xf32> -> vector<128x128xf32>
    %5 = arith.addf %3, %4 : vector<128x128xf32>
    %c2_i32 = arith.constant 2 : i32
    %cst_4 = arith.constant dense<0.000000e+00> : vector<128x128xf32>
    %6 = tpu.matmul %0, %4, %cst_4 {dimension_numbers = #tpu.dot_dimension_numbers<[1], [0], [0], [1], [0, 0, 1, 1], [], []>} : vector<128x128xf32>, vector<128x128xf32>, vector<128x128xf32> -> vector<128x128xf32>
    %7 = arith.addf %5, %6 : vector<128x128xf32>
    %c0_5 = arith.constant 0 : index
    %c0_6 = arith.constant 0 : index
    %8 = vector.load %arg3[%c0_5, %c0_6] : memref<128x128xf32, #tpu.memory_space<vmem>>, vector<128x128xf32>
    tpu.vector_store %arg3[%c0_5, %c0_6], %7 {strides = array<i32>} : memref<128x128xf32, #tpu.memory_space<vmem>>, vector<128x128xf32>,
    return
  }
  func.func @transform_0(%arg0: i32) -> (i32, i32) {
    %c0_i32 = arith.constant 0 : i32
    %c0_i32_0 = arith.constant 0 : i32
    %c0_i32_1 = arith.constant 0 : i32
    return %c0_i32, %c0_i32_0 : i32, i32
  }
  func.func @transform_1(%arg0: i32) -> (i32, i32) {
    %c0_i32 = arith.constant 0 : i32
    %c0_i32_0 = arith.constant 0 : i32
    return %c0_i32, %arg0 : i32, i32
  }
  func.func @transform_2(%arg0: i32) -> (i32, i32) {
    %c0_i32 = arith.constant 0 : i32
    %c0_i32_0 = arith.constant 0 : i32
    return %c0_i32, %arg0 : i32, i32
  }
}

</mosaic_0001>

<llo_original>
// kernel: tpu_custom_call.1
$region0: #{tpu_custom_call.1}
  #allocation0 [shape = 'u32[]', space=smem, size = 0x4, offset = 0x4, fixed_abs, tag = 'smem constant byte address 0x4 - core index']
  #allocation1 [shape = 'u32[144,128]{1,0:T(1,128)}', space=vmem, size = 0x12000, scoped, tag = 'internal scratch']
  %s0 = inlined_call_operand.hbm [shape: f32[128,128], index: 0, kind: input, shape index: {}]
  %s1 = inlined_call_operand.hbm [shape: f32[128,128], index: 1, kind: input, shape index: {}]
  %s2 = inlined_call_operand.hbm [shape: f32[128,128], index: 2, kind: output, shape index: {}]
  %s3 = sld [smem:[#allocation0]]
  $region26: #{tpu_custom_call.1} parent=0
    _
  %s5 = ssub.s32 1, %s3
  %s6 = scalar_select 0, %s5, %s3
  $region1: #{tpu_custom_call.1} parent=0
    #allocation2 [shape = 'u8[65536]{0}', space=vmem, size = 0x10000, scoped, tag = 'input window, operand 0, single buffered']
    #allocation3 [shape = 's32[1]{0}', space=sflag, size = 0x4, scoped, tag = 'scoped memory for tpu_custom_call.1']
    #allocation4 [shape = 's32[1]{0}', space=sflag, size = 0x4, scoped, tag = 'scoped memory for tpu_custom_call.1']
    #allocation5 [shape = 'u8[65536]{0}', space=vmem, size = 0x10000, scoped, tag = 'input window, operand 1, single buffered']
    #allocation6 [shape = 's32[1]{0}', space=sflag, size = 0x4, scoped, tag = 'scoped memory for tpu_custom_call.1']
    #allocation7 [shape = 'u8[65536]{0}', space=vmem, size = 0x10000, scoped, tag = 'output window, operand 0, single buffered']
    %7 = vsyncpa [#allocation3], 0
    %8 = vsyncpa [#allocation6], 0
    %9 = vsyncpa [#allocation4], 0
    // Predicated region
    $region2: #{tpu_custom_call.1} parent=1 // pred_check
      _
    $region3: #{tpu_custom_call.1} parent=1 // pred_check_branch
      %11 = sbr.rel (0) target = $region5
    $region4: #{tpu_custom_call.1} parent=1 // pred_region
      %s13 = ssub.s32 2048, 2048
      %14 = vsyncadd [#allocation3], %s13
      %s15 = sshll.u32 [#allocation2], 4
      %s16 = int_to_ptr.vmem [resolvable:$true] %s15
      %21 = dma.hbm_to_vmem [thread:$0]  %s0, 2048, %s16, [#allocation3], 128, 128, 8
    $region5: #{tpu_custom_call.1} parent=1 // pred_fallthru
      _
    // Predicated region
    $region6: #{tpu_custom_call.1} parent=1 // pred_check
      _
    $region7: #{tpu_custom_call.1} parent=1 // pred_check_branch
      %23 = sbr.rel (0) target = $region9
    $region8: #{tpu_custom_call.1} parent=1 // pred_region
      %s25 = ssub.s32 2048, 2048
      %26 = vsyncadd [#allocation6], %s25
      %s27 = sshll.u32 [#allocation5], 4
      %s28 = int_to_ptr.vmem [resolvable:$true] %s27
      %33 = dma.hbm_to_vmem [thread:$0]  %s1, 2048, %s28, [#allocation6], 128, 128, 8
    $region9: #{tpu_custom_call.1} parent=1 // pred_fallthru
      _
    // Predicated region
    $region10: #{tpu_custom_call.1} parent=1 // pred_check
      _
    $region11: #{tpu_custom_call.1} parent=1 // pred_check_branch
      %35 = sbr.rel (0) target = $region13
    $region12: #{tpu_custom_call.1} parent=1 // pred_region
      %36 = dma.done [#allocation3], 2048
    $region13: #{tpu_custom_call.1} parent=1 // pred_fallthru
      _
    // Predicated region
    $region14: #{tpu_custom_call.1} parent=1 // pred_check
      _
    $region15: #{tpu_custom_call.1} parent=1 // pred_check_branch
      %38 = sbr.rel (0) target = $region17
    $region16: #{tpu_custom_call.1} parent=1 // pred_region
      %39 = dma.done [#allocation6], 2048
    $region17: #{tpu_custom_call.1} parent=1 // pred_fallthru
      _
    %v40 = vld [vmem:[#allocation2] sm:$0xff]
    %v41 = vld [vmem:[#allocation2 + $0x8] sm:$0xff]
    %v42 = vld [vmem:[#allocation2 + $0x10] sm:$0xff]
    %v43 = vld [vmem:[#allocation2 + $0x18] sm:$0xff]
    %v44 = vld [vmem:[#allocation2 + $0x20] sm:$0xff]
    %v45 = vld [vmem:[#allocation2 + $0x28] sm:$0xff]
    %v46 = vld [vmem:[#allocation2 + $0x30] sm:$0xff]
    %v47 = vld [vmem:[#allocation2 + $0x38] sm:$0xff]
    %v48 = vld [vmem:[#allocation2 + $0x40] sm:$0xff]
    %v49 = vld [vmem:[#allocation2 + $0x48] sm:$0xff]
    %v50 = vld [vmem:[#allocation2 + $0x50] sm:$0xff]
    %v51 = vld [vmem:[#allocation2 + $0x58] sm:$0xff]
    %v52 = vld [vmem:[#allocation2 + $0x60] sm:$0xff]
    %v53 = vld [vmem:[#allocation2 + $0x68] sm:$0xff]
    %v54 = vld [vmem:[#allocation2 + $0x70] sm:$0xff]
    %v55 = vld [vmem:[#allocation2 + $0x78] sm:$0xff]
    %v56 = vld [vmem:[#allocation5] sm:$0xff]
    %v57 = vld [vmem:[#allocation5 + $0x8] sm:$0xff]
    %v58 = vld [vmem:[#allocation5 + $0x10] sm:$0xff]
    %v59 = vld [vmem:[#allocation5 + $0x18] sm:$0xff]
    %v60 = vld [vmem:[#allocation5 + $0x20] sm:$0xff]
    %v61 = vld [vmem:[#allocation5 + $0x28] sm:$0xff]
    %v62 = vld [vmem:[#allocation5 + $0x30] sm:$0xff]
    %v63 = vld [vmem:[#allocation5 + $0x38] sm:$0xff]
    %v64 = vld [vmem:[#allocation5 + $0x40] sm:$0xff]
    %v65 = vld [vmem:[#allocation5 + $0x48] sm:$0xff]
    %v66 = vld [vmem:[#allocation5 + $0x50] sm:$0xff]
    %v67 = vld [vmem:[#allocation5 + $0x58] sm:$0xff]
    %v68 = vld [vmem:[#allocation5 + $0x60] sm:$0xff]
    %v69 = vld [vmem:[#allocation5 + $0x68] sm:$0xff]
    %v70 = vld [vmem:[#allocation5 + $0x70] sm:$0xff]
    %v71 = vld [vmem:[#allocation5 + $0x78] sm:$0xff]
    %72 = vmatprep.subr.mxu0 0.0
    %73 = vmatpush1.msra.mxu0 %v56
    %74 = vmatprep.subr.mxu0 0.0
    %75 = vmatpush1.msra.mxu0 %v57
    %76 = vmatprep.subr.mxu0 0.0
    %77 = vmatpush1.msra.mxu0 %v58
    %78 = vmatprep.subr.mxu0 0.0
    %79 = vmatpush1.msra.mxu0 %v59
    %80 = vmatprep.subr.mxu0 0.0
    %81 = vmatpush1.msra.mxu0 %v60
    %82 = vmatprep.subr.mxu0 0.0
    %83 = vmatpush1.msra.mxu0 %v61
    %84 = vmatprep.subr.mxu0 0.0
    %85 = vmatpush1.msra.mxu0 %v62
    %86 = vmatprep.subr.mxu0 0.0
    %87 = vmatpush1.msra.mxu0 %v63
    %88 = vmatprep.subr.mxu0 0.0
    %89 = vmatpush1.msra.mxu0 %v64
    %90 = vmatprep.subr.mxu0 0.0
    %91 = vmatpush1.msra.mxu0 %v65
    %92 = vmatprep.subr.mxu0 0.0
    %93 = vmatpush1.msra.mxu0 %v66
    %94 = vmatprep.subr.mxu0 0.0
    %95 = vmatpush1.msra.mxu0 %v67
    %96 = vmatprep.subr.mxu0 0.0
    %97 = vmatpush1.msra.mxu0 %v68
    %98 = vmatprep.subr.mxu0 0.0
    %99 = vmatpush1.msra.mxu0 %v69
    %100 = vmatprep.subr.mxu0 0.0
    %101 = vmatpush1.msra.mxu0 %v70
    %102 = vmatprep.subr.mxu0 0.0
    %103 = vmatpush1.msra.mxu0 %v71
    %104 = vmatprep.subr.mxu0 0.0
    %105 = vmatpush1.msra.mxu0 0.0
    %106 = vmatprep.subr.mxu0 0.0
    %107 = vmatpush1.msra.mxu0 0.0
    %108 = vmatprep.subr.mxu0 0.0
    %109 = vmatpush1.msra.mxu0 0.0
    %110 = vmatprep.subr.mxu0 0.0
    %111 = vmatpush1.msra.mxu0 0.0
    %112 = vmatprep.subr.mxu0 0.0
    %113 = vmatpush1.msra.mxu0 0.0
    %114 = vmatprep.subr.mxu0 0.0
    %115 = vmatpush1.msra.mxu0 0.0
    %116 = vmatprep.subr.mxu0 0.0
    %117 = vmatpush1.msra.mxu0 0.0
    %118 = vmatprep.subr.mxu0 0.0
    %119 = vmatpush1.msra.mxu0 0.0
    %120 = vmatprep.subr.mxu0 0.0
    %121 = vmatpush1.msra.mxu0 0.0
    %122 = vmatprep.subr.mxu0 0.0
    %123 = vmatpush1.msra.mxu0 0.0
    %124 = vmatprep.subr.mxu0 0.0
    %125 = vmatpush1.msra.mxu0 0.0
    %126 = vmatprep.subr.mxu0 0.0
    %127 = vmatpush1.msra.mxu0 0.0
    %128 = vmatprep.subr.mxu0 0.0
    %129 = vmatpush1.msra.mxu0 0.0
    %130 = vmatprep.subr.mxu0 0.0
    %131 = vmatpush1.msra.mxu0 0.0
    %132 = vmatprep.subr.mxu0 0.0
    %133 = vmatpush1.msra.mxu0 0.0
    %134 = vmatprep.subr.mxu0 0.0
    %135 = vmatpush1.msra.mxu0 0.0
    %136 = vmatprep.mubr.f32.mxu0 0.0
    %137 = vmatmul.mubr.f32.gmra.mrb[0].mxu0 %v40
    %v138 = vpop.f32.mrb[0].mxu0
    %v139 = vadd.f32 0.0, %v138
    %v140 = vpop.f32.mrb[0].mxu0
    %141 = vmatprep.mubr.f32.mxu0 0.0
    %142 = vmatmul.mubr.f32.gmra.mrb[0].mxu0 %v41
    %v143 = vpop.f32.mrb[0].mxu0
    %v144 = vadd.f32 0.0, %v143
    %v145 = vpop.f32.mrb[0].mxu0
    %146 = vmatprep.mubr.f32.mxu0 0.0
    %147 = vmatmul.mubr.f32.gmra.mrb[0].mxu0 %v42
    %v148 = vpop.f32.mrb[0].mxu0
    %v149 = vadd.f32 0.0, %v148
    %v150 = vpop.f32.mrb[0].mxu0
    %151 = vmatprep.mubr.f32.mxu0 0.0
    %152 = vmatmul.mubr.f32.gmra.mrb[0].mxu0 %v43
    %v153 = vpop.f32.mrb[0].mxu0
    %v154 = vadd.f32 0.0, %v153
    %v155 = vpop.f32.mrb[0].mxu0
    %156 = vmatprep.mubr.f32.mxu0 0.0
    %157 = vmatmul.mubr.f32.gmra.mrb[0].mxu0 %v44
    %v158 = vpop.f32.mrb[0].mxu0
    %v159 = vadd.f32 0.0, %v158
    %v160 = vpop.f32.mrb[0].mxu0
    %161 = vmatprep.mubr.f32.mxu0 0.0
    %162 = vmatmul.mubr.f32.gmra.mrb[0].mxu0 %v45
    %v163 = vpop.f32.mrb[0].mxu0
    %v164 = vadd.f32 0.0, %v163
    %v165 = vpop.f32.mrb[0].mxu0
    %166 = vmatprep.mubr.f32.mxu0 0.0
    %167 = vmatmul.mubr.f32.gmra.mrb[0].mxu0 %v46
    %v168 = vpop.f32.mrb[0].mxu0
    %v169 = vadd.f32 0.0, %v168
    %v170 = vpop.f32.mrb[0].mxu0
    %171 = vmatprep.mubr.f32.mxu0 0.0
    %172 = vmatmul.mubr.f32.gmra.mrb[0].mxu0 %v47
    %v173 = vpop.f32.mrb[0].mxu0
    %v174 = vadd.f32 0.0, %v173
    %v175 = vpop.f32.mrb[0].mxu0
    %176 = vmatprep.mubr.f32.mxu0 0.0
    %177 = vmatmul.mubr.f32.gmra.mrb[0].mxu0 %v48
    %v178 = vpop.f32.mrb[0].mxu0
    %v179 = vadd.f32 0.0, %v178
    %v180 = vpop.f32.mrb[0].mxu0
    %181 = vmatprep.mubr.f32.mxu0 0.0
    %182 = vmatmul.mubr.f32.gmra.mrb[0].mxu0 %v49
    %v183 = vpop.f32.mrb[0].mxu0
    %v184 = vadd.f32 0.0, %v183
    %v185 = vpop.f32.mrb[0].mxu0
    %186 = vmatprep.mubr.f32.mxu0 0.0
    %187 = vmatmul.mubr.f32.gmra.mrb[0].mxu0 %v50
    %v188 = vpop.f32.mrb[0].mxu0
    %v189 = vadd.f32 0.0, %v188
    %v190 = vpop.f32.mrb[0].mxu0
    %191 = vmatprep.mubr.f32.mxu0 0.0
    %192 = vmatmul.mubr.f32.gmra.mrb[0].mxu0 %v51
    %v193 = vpop.f32.mrb[0].mxu0
    %v194 = vadd.f32 0.0, %v193
    %v195 = vpop.f32.mrb[0].mxu0
    %196 = vmatprep.mubr.f32.mxu0 0.0
    %197 = vmatmul.mubr.f32.gmra.mrb[0].mxu0 %v52
    %v198 = vpop.f32.mrb[0].mxu0
    %v199 = vadd.f32 0.0, %v198
    %v200 = vpop.f32.mrb[0].mxu0
    %201 = vmatprep.mubr.f32.mxu0 0.0
    %202 = vmatmul.mubr.f32.gmra.mrb[0].mxu0 %v53
    %v203 = vpop.f32.mrb[0].mxu0
    %v204 = vadd.f32 0.0, %v203
    %v205 = vpop.f32.mrb[0].mxu0
    %206 = vmatprep.mubr.f32.mxu0 0.0
    %207 = vmatmul.mubr.f32.gmra.mrb[0].mxu0 %v54
    %v208 = vpop.f32.mrb[0].mxu0
    %v209 = vadd.f32 0.0, %v208
    %v210 = vpop.f32.mrb[0].mxu0
    %211 = vmatprep.mubr.f32.mxu0 0.0
    %212 = vmatmul.mubr.f32.gmra.mrb[0].mxu0 %v55
    %v213 = vpop.f32.mrb[0].mxu0
    %v214 = vadd.f32 0.0, %v213
    %v215 = vpop.f32.mrb[0].mxu0
    %216 = vdwg.mxu0
    %v217 = vadd.f32 %v56, %v139
    %v218 = vadd.f32 %v57, %v144
    %v219 = vadd.f32 %v58, %v149
    %v220 = vadd.f32 %v59, %v154
    %v221 = vadd.f32 %v60, %v159
    %v222 = vadd.f32 %v61, %v164
    %v223 = vadd.f32 %v62, %v169
    %v224 = vadd.f32 %v63, %v174
    %v225 = vadd.f32 %v64, %v179
    %v226 = vadd.f32 %v65, %v184
    %v227 = vadd.f32 %v66, %v189
    %v228 = vadd.f32 %v67, %v194
    %v229 = vadd.f32 %v68, %v199
    %v230 = vadd.f32 %v69, %v204
    %v231 = vadd.f32 %v70, %v209
    %v232 = vadd.f32 %v71, %v214
    %233 = vmatprep.subr.mxu0 0.0
    %234 = vmatpush1.msra.mxu0 %v139
    %235 = vmatprep.subr.mxu0 0.0
    %236 = vmatpush1.msra.mxu0 %v144
    %237 = vmatprep.subr.mxu0 0.0
    %238 = vmatpush1.msra.mxu0 %v149
    %239 = vmatprep.subr.mxu0 0.0
    %240 = vmatpush1.msra.mxu0 %v154
    %241 = vmatprep.subr.mxu0 0.0
    %242 = vmatpush1.msra.mxu0 %v159
    %243 = vmatprep.subr.mxu0 0.0
    %244 = vmatpush1.msra.mxu0 %v164
    %245 = vmatprep.subr.mxu0 0.0
    %246 = vmatpush1.msra.mxu0 %v169
    %247 = vmatprep.subr.mxu0 0.0
    %248 = vmatpush1.msra.mxu0 %v174
    %249 = vmatprep.subr.mxu0 0.0
    %250 = vmatpush1.msra.mxu0 %v179
    %251 = vmatprep.subr.mxu0 0.0
    %252 = vmatpush1.msra.mxu0 %v184
    %253 = vmatprep.subr.mxu0 0.0
    %254 = vmatpush1.msra.mxu0 %v189
    %255 = vmatprep.subr.mxu0 0.0
    %256 = vmatpush1.msra.mxu0 %v194
    %257 = vmatprep.subr.mxu0 0.0
    %258 = vmatpush1.msra.mxu0 %v199
    %259 = vmatprep.subr.mxu0 0.0
    %260 = vmatpush1.msra.mxu0 %v204
    %261 = vmatprep.subr.mxu0 0.0
    %262 = vmatpush1.msra.mxu0 %v209
    %263 = vmatprep.subr.mxu0 0.0
    %264 = vmatpush1.msra.mxu0 %v214
    %265 = vmatprep.subr.mxu0 0.0
    %266 = vmatpush1.msra.mxu0 0.0
    %267 = vmatprep.subr.mxu0 0.0
    %268 = vmatpush1.msra.mxu0 0.0
    %269 = vmatprep.subr.mxu0 0.0
    %270 = vmatpush1.msra.mxu0 0.0
    %271 = vmatprep.subr.mxu0 0.0
    %272 = vmatpush1.msra.mxu0 0.0
    %273 = vmatprep.subr.mxu0 0.0
    %274 = vmatpush1.msra.mxu0 0.0
    %275 = vmatprep.subr.mxu0 0.0
    %276 = vmatpush1.msra.mxu0 0.0
    %277 = vmatprep.subr.mxu0 0.0
    %278 = vmatpush1.msra.mxu0 0.0
    %279 = vmatprep.subr.mxu0 0.0
    %280 = vmatpush1.msra.mxu0 0.0
    %281 = vmatprep.subr.mxu0 0.0
    %282 = vmatpush1.msra.mxu0 0.0
    %283 = vmatprep.subr.mxu0 0.0
    %284 = vmatpush1.msra.mxu0 0.0
    %285 = vmatprep.subr.mxu0 0.0
    %286 = vmatpush1.msra.mxu0 0.0
    %287 = vmatprep.subr.mxu0 0.0
    %288 = vmatpush1.msra.mxu0 0.0
    %289 = vmatprep.subr.mxu0 0.0
    %290 = vmatpush1.msra.mxu0 0.0
    %291 = vmatprep.subr.mxu0 0.0
    %292 = vmatpush1.msra.mxu0 0.0
    %293 = vmatprep.subr.mxu0 0.0
    %294 = vmatpush1.msra.mxu0 0.0
    %295 = vmatprep.subr.mxu0 0.0
    %296 = vmatpush1.msra.mxu0 0.0
    %297 = vmatprep.mubr.f32.mxu0 0.0
    %298 = vmatmul.mubr.f32.gmra.mrb[0].mxu0 %v40
    %v299 = vpop.f32.mrb[0].mxu0
    %v300 = vadd.f32 0.0, %v299
    %v301 = vpop.f32.mrb[0].mxu0
    %302 = vmatprep.mubr.f32.mxu0 0.0
    %303 = vmatmul.mubr.f32.gmra.mrb[0].mxu0 %v41
    %v304 = vpop.f32.mrb[0].mxu0
    %v305 = vadd.f32 0.0, %v304
    %v306 = vpop.f32.mrb[0].mxu0
    %307 = vmatprep.mubr.f32.mxu0 0.0
    %308 = vmatmul.mubr.f32.gmra.mrb[0].mxu0 %v42
    %v309 = vpop.f32.mrb[0].mxu0
    %v310 = vadd.f32 0.0, %v309
    %v311 = vpop.f32.mrb[0].mxu0
    %312 = vmatprep.mubr.f32.mxu0 0.0
    %313 = vmatmul.mubr.f32.gmra.mrb[0].mxu0 %v43
    %v314 = vpop.f32.mrb[0].mxu0
    %v315 = vadd.f32 0.0, %v314
    %v316 = vpop.f32.mrb[0].mxu0
    %317 = vmatprep.mubr.f32.mxu0 0.0
    %318 = vmatmul.mubr.f32.gmra.mrb[0].mxu0 %v44
    %v319 = vpop.f32.mrb[0].mxu0
    %v320 = vadd.f32 0.0, %v319
    %v321 = vpop.f32.mrb[0].mxu0
    %322 = vmatprep.mubr.f32.mxu0 0.0
    %323 = vmatmul.mubr.f32.gmra.mrb[0].mxu0 %v45
    %v324 = vpop.f32.mrb[0].mxu0
    %v325 = vadd.f32 0.0, %v324
    %v326 = vpop.f32.mrb[0].mxu0
    %327 = vmatprep.mubr.f32.mxu0 0.0
    %328 = vmatmul.mubr.f32.gmra.mrb[0].mxu0 %v46
    %v329 = vpop.f32.mrb[0].mxu0
    %v330 = vadd.f32 0.0, %v329
    %v331 = vpop.f32.mrb[0].mxu0
    %332 = vmatprep.mubr.f32.mxu0 0.0
    %333 = vmatmul.mubr.f32.gmra.mrb[0].mxu0 %v47
    %v334 = vpop.f32.mrb[0].mxu0
    %v335 = vadd.f32 0.0, %v334
    %v336 = vpop.f32.mrb[0].mxu0
    %337 = vmatprep.mubr.f32.mxu0 0.0
    %338 = vmatmul.mubr.f32.gmra.mrb[0].mxu0 %v48
    %v339 = vpop.f32.mrb[0].mxu0
    %v340 = vadd.f32 0.0, %v339
    %v341 = vpop.f32.mrb[0].mxu0
    %342 = vmatprep.mubr.f32.mxu0 0.0
    %343 = vmatmul.mubr.f32.gmra.mrb[0].mxu0 %v49
    %v344 = vpop.f32.mrb[0].mxu0
    %v345 = vadd.f32 0.0, %v344
    %v346 = vpop.f32.mrb[0].mxu0
    %347 = vmatprep.mubr.f32.mxu0 0.0
    %348 = vmatmul.mubr.f32.gmra.mrb[0].mxu0 %v50
    %v349 = vpop.f32.mrb[0].mxu0
    %v350 = vadd.f32 0.0, %v349
    %v351 = vpop.f32.mrb[0].mxu0
    %352 = vmatprep.mubr.f32.mxu0 0.0
    %353 = vmatmul.mubr.f32.gmra.mrb[0].mxu0 %v51
    %v354 = vpop.f32.mrb[0].mxu0
    %v355 = vadd.f32 0.0, %v354
    %v356 = vpop.f32.mrb[0].mxu0
    %357 = vmatprep.mubr.f32.mxu0 0.0
    %358 = vmatmul.mubr.f32.gmra.mrb[0].mxu0 %v52
    %v359 = vpop.f32.mrb[0].mxu0
    %v360 = vadd.f32 0.0, %v359
    %v361 = vpop.f32.mrb[0].mxu0
    %362 = vmatprep.mubr.f32.mxu0 0.0
    %363 = vmatmul.mubr.f32.gmra.mrb[0].mxu0 %v53
    %v364 = vpop.f32.mrb[0].mxu0
    %v365 = vadd.f32 0.0, %v364
    %v366 = vpop.f32.mrb[0].mxu0
    %367 = vmatprep.mubr.f32.mxu0 0.0
    %368 = vmatmul.mubr.f32.gmra.mrb[0].mxu0 %v54
    %v369 = vpop.f32.mrb[0].mxu0
    %v370 = vadd.f32 0.0, %v369
    %v371 = vpop.f32.mrb[0].mxu0
    %372 = vmatprep.mubr.f32.mxu0 0.0
    %373 = vmatmul.mubr.f32.gmra.mrb[0].mxu0 %v55
    %v374 = vpop.f32.mrb[0].mxu0
    %v375 = vadd.f32 0.0, %v374
    %v376 = vpop.f32.mrb[0].mxu0
    %377 = vdwg.mxu0
    %v378 = vadd.f32 %v217, %v300
    %v379 = vadd.f32 %v218, %v305
    %v380 = vadd.f32 %v219, %v310
    %v381 = vadd.f32 %v220, %v315
    %v382 = vadd.f32 %v221, %v320
    %v383 = vadd.f32 %v222, %v325
    %v384 = vadd.f32 %v223, %v330
    %v385 = vadd.f32 %v224, %v335
    %v386 = vadd.f32 %v225, %v340
    %v387 = vadd.f32 %v226, %v345
    %v388 = vadd.f32 %v227, %v350
    %v389 = vadd.f32 %v228, %v355
    %v390 = vadd.f32 %v229, %v360
    %v391 = vadd.f32 %v230, %v365
    %v392 = vadd.f32 %v231, %v370
    %v393 = vadd.f32 %v232, %v375
    %394 = vmatprep.subr.mxu0 0.0
    %395 = vmatpush1.msra.mxu0 %v300
    %396 = vmatprep.subr.mxu0 0.0
    %397 = vmatpush1.msra.mxu0 %v305
    %398 = vmatprep.subr.mxu0 0.0
    %399 = vmatpush1.msra.mxu0 %v310
    %400 = vmatprep.subr.mxu0 0.0
    %401 = vmatpush1.msra.mxu0 %v315
    %402 = vmatprep.subr.mxu0 0.0
    %403 = vmatpush1.msra.mxu0 %v320
    %404 = vmatprep.subr.mxu0 0.0
    %405 = vmatpush1.msra.mxu0 %v325
    %406 = vmatprep.subr.mxu0 0.0
    %407 = vmatpush1.msra.mxu0 %v330
    %408 = vmatprep.subr.mxu0 0.0
    %409 = vmatpush1.msra.mxu0 %v335
    %410 = vmatprep.subr.mxu0 0.0
    %411 = vmatpush1.msra.mxu0 %v340
    %412 = vmatprep.subr.mxu0 0.0
    %413 = vmatpush1.msra.mxu0 %v345
    %414 = vmatprep.subr.mxu0 0.0
    %415 = vmatpush1.msra.mxu0 %v350
    %416 = vmatprep.subr.mxu0 0.0
    %417 = vmatpush1.msra.mxu0 %v355
    %418 = vmatprep.subr.mxu0 0.0
    %419 = vmatpush1.msra.mxu0 %v360
    %420 = vmatprep.subr.mxu0 0.0
    %421 = vmatpush1.msra.mxu0 %v365
    %422 = vmatprep.subr.mxu0 0.0
    %423 = vmatpush1.msra.mxu0 %v370
    %424 = vmatprep.subr.mxu0 0.0
    %425 = vmatpush1.msra.mxu0 %v375
    %426 = vmatprep.subr.mxu0 0.0
    %427 = vmatpush1.msra.mxu0 0.0
    %428 = vmatprep.subr.mxu0 0.0
    %429 = vmatpush1.msra.mxu0 0.0
    %430 = vmatprep.subr.mxu0 0.0
    %431 = vmatpush1.msra.mxu0 0.0
    %432 = vmatprep.subr.mxu0 0.0
    %433 = vmatpush1.msra.mxu0 0.0
    %434 = vmatprep.subr.mxu0 0.0
    %435 = vmatpush1.msra.mxu0 0.0
    %436 = vmatprep.subr.mxu0 0.0
    %437 = vmatpush1.msra.mxu0 0.0
    %438 = vmatprep.subr.mxu0 0.0
    %439 = vmatpush1.msra.mxu0 0.0
    %440 = vmatprep.subr.mxu0 0.0
    %441 = vmatpush1.msra.mxu0 0.0
    %442 = vmatprep.subr.mxu0 0.0
    %443 = vmatpush1.msra.mxu0 0.0
    %444 = vmatprep.subr.mxu0 0.0
    %445 = vmatpush1.msra.mxu0 0.0
    %446 = vmatprep.subr.mxu0 0.0
    %447 = vmatpush1.msra.mxu0 0.0
    %448 = vmatprep.subr.mxu0 0.0
    %449 = vmatpush1.msra.mxu0 0.0
    %450 = vmatprep.subr.mxu0 0.0
    %451 = vmatpush1.msra.mxu0 0.0
    %452 = vmatprep.subr.mxu0 0.0
    %453 = vmatpush1.msra.mxu0 0.0
    %454 = vmatprep.subr.mxu0 0.0
    %455 = vmatpush1.msra.mxu0 0.0
    %456 = vmatprep.subr.mxu0 0.0
    %457 = vmatpush1.msra.mxu0 0.0
    %458 = vmatprep.mubr.f32.mxu0 0.0
    %459 = vmatmul.mubr.f32.gmra.mrb[0].mxu0 %v40
    %v460 = vpop.f32.mrb[0].mxu0
    %v461 = vadd.f32 0.0, %v460
    %v462 = vpop.f32.mrb[0].mxu0
    %463 = vmatprep.mubr.f32.mxu0 0.0
    %464 = vmatmul.mubr.f32.gmra.mrb[0].mxu0 %v41
    %v465 = vpop.f32.mrb[0].mxu0
    %v466 = vadd.f32 0.0, %v465
    %v467 = vpop.f32.mrb[0].mxu0
    %468 = vmatprep.mubr.f32.mxu0 0.0
    %469 = vmatmul.mubr.f32.gmra.mrb[0].mxu0 %v42
    %v470 = vpop.f32.mrb[0].mxu0
    %v471 = vadd.f32 0.0, %v470
    %v472 = vpop.f32.mrb[0].mxu0
    %473 = vmatprep.mubr.f32.mxu0 0.0
    %474 = vmatmul.mubr.f32.gmra.mrb[0].mxu0 %v43
    %v475 = vpop.f32.mrb[0].mxu0
    %v476 = vadd.f32 0.0, %v475
    %v477 = vpop.f32.mrb[0].mxu0
    %478 = vmatprep.mubr.f32.mxu0 0.0
    %479 = vmatmul.mubr.f32.gmra.mrb[0].mxu0 %v44
    %v480 = vpop.f32.mrb[0].mxu0
    %v481 = vadd.f32 0.0, %v480
    %v482 = vpop.f32.mrb[0].mxu0
    %483 = vmatprep.mubr.f32.mxu0 0.0
    %484 = vmatmul.mubr.f32.gmra.mrb[0].mxu0 %v45
    %v485 = vpop.f32.mrb[0].mxu0
    %v486 = vadd.f32 0.0, %v485
    %v487 = vpop.f32.mrb[0].mxu0
    %488 = vmatprep.mubr.f32.mxu0 0.0
    %489 = vmatmul.mubr.f32.gmra.mrb[0].mxu0 %v46
    %v490 = vpop.f32.mrb[0].mxu0
    %v491 = vadd.f32 0.0, %v490
    %v492 = vpop.f32.mrb[0].mxu0
    %493 = vmatprep.mubr.f32.mxu0 0.0
    %494 = vmatmul.mubr.f32.gmra.mrb[0].mxu0 %v47
    %v495 = vpop.f32.mrb[0].mxu0
    %v496 = vadd.f32 0.0, %v495
    %v497 = vpop.f32.mrb[0].mxu0
    %498 = vmatprep.mubr.f32.mxu0 0.0
    %499 = vmatmul.mubr.f32.gmra.mrb[0].mxu0 %v48
    %v500 = vpop.f32.mrb[0].mxu0
    %v501 = vadd.f32 0.0, %v500
    %v502 = vpop.f32.mrb[0].mxu0
    %503 = vmatprep.mubr.f32.mxu0 0.0
    %504 = vmatmul.mubr.f32.gmra.mrb[0].mxu0 %v49
    %v505 = vpop.f32.mrb[0].mxu0
    %v506 = vadd.f32 0.0, %v505
    %v507 = vpop.f32.mrb[0].mxu0
    %508 = vmatprep.mubr.f32.mxu0 0.0
    %509 = vmatmul.mubr.f32.gmra.mrb[0].mxu0 %v50
    %v510 = vpop.f32.mrb[0].mxu0
    %v511 = vadd.f32 0.0, %v510
    %v512 = vpop.f32.mrb[0].mxu0
    %513 = vmatprep.mubr.f32.mxu0 0.0
    %514 = vmatmul.mubr.f32.gmra.mrb[0].mxu0 %v51
    %v515 = vpop.f32.mrb[0].mxu0
    %v516 = vadd.f32 0.0, %v515
    %v517 = vpop.f32.mrb[0].mxu0
    %518 = vmatprep.mubr.f32.mxu0 0.0
    %519 = vmatmul.mubr.f32.gmra.mrb[0].mxu0 %v52
    %v520 = vpop.f32.mrb[0].mxu0
    %v521 = vadd.f32 0.0, %v520
    %v522 = vpop.f32.mrb[0].mxu0
    %523 = vmatprep.mubr.f32.mxu0 0.0
    %524 = vmatmul.mubr.f32.gmra.mrb[0].mxu0 %v53
    %v525 = vpop.f32.mrb[0].mxu0
    %v526 = vadd.f32 0.0, %v525
    %v527 = vpop.f32.mrb[0].mxu0
    %528 = vmatprep.mubr.f32.mxu0 0.0
    %529 = vmatmul.mubr.f32.gmra.mrb[0].mxu0 %v54
    %v530 = vpop.f32.mrb[0].mxu0
    %v531 = vadd.f32 0.0, %v530
    %v532 = vpop.f32.mrb[0].mxu0
    %533 = vmatprep.mubr.f32.mxu0 0.0
    %534 = vmatmul.mubr.f32.gmra.mrb[0].mxu0 %v55
    %v535 = vpop.f32.mrb[0].mxu0
    %v536 = vadd.f32 0.0, %v535
    %v537 = vpop.f32.mrb[0].mxu0
    %538 = vdwg.mxu0
    %v539 = vadd.f32 %v378, %v461
    %v540 = vadd.f32 %v379, %v466
    %v541 = vadd.f32 %v380, %v471
    %v542 = vadd.f32 %v381, %v476
    %v543 = vadd.f32 %v382, %v481
    %v544 = vadd.f32 %v383, %v486
    %v545 = vadd.f32 %v384, %v491
    %v546 = vadd.f32 %v385, %v496
    %v547 = vadd.f32 %v386, %v501
    %v548 = vadd.f32 %v387, %v506
    %v549 = vadd.f32 %v388, %v511
    %v550 = vadd.f32 %v389, %v516
    %v551 = vadd.f32 %v390, %v521
    %v552 = vadd.f32 %v391, %v526
    %v553 = vadd.f32 %v392, %v531
    %v554 = vadd.f32 %v393, %v536
    %555 = vst [vmem:[#allocation7] sm:$0xff] %v539
    %556 = vst [vmem:[#allocation7 + $0x8] sm:$0xff] %v540
    %557 = vst [vmem:[#allocation7 + $0x10] sm:$0xff] %v541
    %558 = vst [vmem:[#allocation7 + $0x18] sm:$0xff] %v542
    %559 = vst [vmem:[#allocation7 + $0x20] sm:$0xff] %v543
    %560 = vst [vmem:[#allocation7 + $0x28] sm:$0xff] %v544
    %561 = vst [vmem:[#allocation7 + $0x30] sm:$0xff] %v545
    %562 = vst [vmem:[#allocation7 + $0x38] sm:$0xff] %v546
    %563 = vst [vmem:[#allocation7 + $0x40] sm:$0xff] %v547
    %564 = vst [vmem:[#allocation7 + $0x48] sm:$0xff] %v548
    %565 = vst [vmem:[#allocation7 + $0x50] sm:$0xff] %v549
    %566 = vst [vmem:[#allocation7 + $0x58] sm:$0xff] %v550
    %567 = vst [vmem:[#allocation7 + $0x60] sm:$0xff] %v551
    %568 = vst [vmem:[#allocation7 + $0x68] sm:$0xff] %v552
    %569 = vst [vmem:[#allocation7 + $0x70] sm:$0xff] %v553
    %570 = vst [vmem:[#allocation7 + $0x78] sm:$0xff] %v554
    // Predicated region
    $region18: #{tpu_custom_call.1} parent=1 // pred_check
      _
    $region19: #{tpu_custom_call.1} parent=1 // pred_check_branch
      %572 = sbr.rel (0) target = $region21
    $region20: #{tpu_custom_call.1} parent=1 // pred_region
      %s574 = ssub.s32 2048, 2048
      %575 = vsyncadd [#allocation4], %s574
      %s576 = sshll.u32 [#allocation7], 4
      %s577 = int_to_ptr.vmem [resolvable:$true] %s576
      %582 = dma.vmem_to_hbm [thread:$0]  %s577, 2048, %s2, [#allocation4], 128, 128, 8
    $region21: #{tpu_custom_call.1} parent=1 // pred_fallthru
      _
    // Predicated region
    $region22: #{tpu_custom_call.1} parent=1 // pred_check
      _
    $region23: #{tpu_custom_call.1} parent=1 // pred_check_branch
      %584 = sbr.rel (0) target = $region25
    $region24: #{tpu_custom_call.1} parent=1 // pred_region
      %585 = dma.done [#allocation4], 2048
    $region25: #{tpu_custom_call.1} parent=1 // pred_fallthru
      _
    %586 = vsyncpa [#allocation3], 1
    %587 = vsyncpa [#allocation6], 1
    %588 = vsyncpa [#allocation4], 1

// kernel: tpu_custom_call.1
$region0: #{tpu_custom_call.1}
  #allocation0 [shape = 'u32[]', space=smem, size = 0x4, offset = 0x4, fixed_abs, tag = 'smem constant byte address 0x4 - core index']
  #allocation1 [shape = 'u32[144,128]{1,0:T(1,128)}', space=vmem, size = 0x12000, scoped, tag = 'internal scratch']
  %s0 = inlined_call_operand.hbm [shape: f32[128,128], index: 0, kind: input, shape index: {}]
  %s1 = inlined_call_operand.hbm [shape: f32[128,128], index: 1, kind: input, shape index: {}]
  %s2 = inlined_call_operand.hbm [shape: f32[128,128], index: 2, kind: output, shape index: {}]
  %s3 = sld [smem:[#allocation0]]
  $region26: #{tpu_custom_call.1} parent=0
    _
  %s5 = ssub.s32 1, %s3
  %s6 = scalar_select 0, %s5, %s3
  $region1: #{tpu_custom_call.1} parent=0
    #allocation2 [shape = 'u8[65536]{0}', space=vmem, size = 0x10000, scoped, tag = 'input window, operand 0, single buffered']
    #allocation3 [shape = 's32[1]{0}', space=sflag, size = 0x4, scoped, tag = 'scoped memory for tpu_custom_call.1']
    #allocation4 [shape = 's32[1]{0}', space=sflag, size = 0x4, scoped, tag = 'scoped memory for tpu_custom_call.1']
    #allocation5 [shape = 'u8[65536]{0}', space=vmem, size = 0x10000, scoped, tag = 'input window, operand 1, single buffered']
    #allocation6 [shape = 's32[1]{0}', space=sflag, size = 0x4, scoped, tag = 'scoped memory for tpu_custom_call.1']
    #allocation7 [shape = 'u8[65536]{0}', space=vmem, size = 0x10000, scoped, tag = 'output window, operand 0, single buffered']
    %7 = vsyncpa [#allocation3], 0
    %8 = vsyncpa [#allocation6], 0
    %9 = vsyncpa [#allocation4], 0
    // Predicated region
    $region2: #{tpu_custom_call.1} parent=1 // pred_check
      _
    $region3: #{tpu_custom_call.1} parent=1 // pred_check_branch
      %11 = sbr.rel (0) target = $region5
    $region4: #{tpu_custom_call.1} parent=1 // pred_region
      %s13 = ssub.s32 2048, 2048
      %14 = vsyncadd [#allocation3], %s13
      %s15 = sshll.u32 [#allocation2], 4
      %s16 = int_to_ptr.vmem [resolvable:$true] %s15
      %21 = dma.hbm_to_vmem [thread:$0]  %s0, 2048, %s16, [#allocation3], 128, 128, 8
    $region5: #{tpu_custom_call.1} parent=1 // pred_fallthru
      _
    // Predicated region
    $region6: #{tpu_custom_call.1} parent=1 // pred_check
      _
    $region7: #{tpu_custom_call.1} parent=1 // pred_check_branch
      %23 = sbr.rel (0) target = $region9
    $region8: #{tpu_custom_call.1} parent=1 // pred_region
      %s25 = ssub.s32 2048, 2048
      %26 = vsyncadd [#allocation6], %s25
      %s27 = sshll.u32 [#allocation5], 4
      %s28 = int_to_ptr.vmem [resolvable:$true] %s27
      %33 = dma.hbm_to_vmem [thread:$0]  %s1, 2048, %s28, [#allocation6], 128, 128, 8
    $region9: #{tpu_custom_call.1} parent=1 // pred_fallthru
      _
    // Predicated region
    $region10: #{tpu_custom_call.1} parent=1 // pred_check
      _
    $region11: #{tpu_custom_call.1} parent=1 // pred_check_branch
      %35 = sbr.rel (0) target = $region13
    $region12: #{tpu_custom_call.1} parent=1 // pred_region
      %36 = dma.done [#allocation3], 2048
    $region13: #{tpu_custom_call.1} parent=1 // pred_fallthru
      _
    // Predicated region
    $region14: #{tpu_custom_call.1} parent=1 // pred_check
      _
    $region15: #{tpu_custom_call.1} parent=1 // pred_check_branch
      %38 = sbr.rel (0) target = $region17
    $region16: #{tpu_custom_call.1} parent=1 // pred_region
      %39 = dma.done [#allocation6], 2048
    $region17: #{tpu_custom_call.1} parent=1 // pred_fallthru
      _
    %v40 = vld [vmem:[#allocation2] sm:$0xff]
    %v41 = vld [vmem:[#allocation2 + $0x8] sm:$0xff]
    %v42 = vld [vmem:[#allocation2 + $0x10] sm:$0xff]
    %v43 = vld [vmem:[#allocation2 + $0x18] sm:$0xff]
    %v44 = vld [vmem:[#allocation2 + $0x20] sm:$0xff]
    %v45 = vld [vmem:[#allocation2 + $0x28] sm:$0xff]
    %v46 = vld [vmem:[#allocation2 + $0x30] sm:$0xff]
    %v47 = vld [vmem:[#allocation2 + $0x38] sm:$0xff]
    %v48 = vld [vmem:[#allocation2 + $0x40] sm:$0xff]
    %v49 = vld [vmem:[#allocation2 + $0x48] sm:$0xff]
    %v50 = vld [vmem:[#allocation2 + $0x50] sm:$0xff]
    %v51 = vld [vmem:[#allocation2 + $0x58] sm:$0xff]
    %v52 = vld [vmem:[#allocation2 + $0x60] sm:$0xff]
    %v53 = vld [vmem:[#allocation2 + $0x68] sm:$0xff]
    %v54 = vld [vmem:[#allocation2 + $0x70] sm:$0xff]
    %v55 = vld [vmem:[#allocation2 + $0x78] sm:$0xff]
    %v56 = vld [vmem:[#allocation5] sm:$0xff]
    %v57 = vld [vmem:[#allocation5 + $0x8] sm:$0xff]
    %v58 = vld [vmem:[#allocation5 + $0x10] sm:$0xff]
    %v59 = vld [vmem:[#allocation5 + $0x18] sm:$0xff]
    %v60 = vld [vmem:[#allocation5 + $0x20] sm:$0xff]
    %v61 = vld [vmem:[#allocation5 + $0x28] sm:$0xff]
    %v62 = vld [vmem:[#allocation5 + $0x30] sm:$0xff]
    %v63 = vld [vmem:[#allocation5 + $0x38] sm:$0xff]
    %v64 = vld [vmem:[#allocation5 + $0x40] sm:$0xff]
    %v65 = vld [vmem:[#allocation5 + $0x48] sm:$0xff]
    %v66 = vld [vmem:[#allocation5 + $0x50] sm:$0xff]
    %v67 = vld [vmem:[#allocation5 + $0x58] sm:$0xff]
    %v68 = vld [vmem:[#allocation5 + $0x60] sm:$0xff]
    %v69 = vld [vmem:[#allocation5 + $0x68] sm:$0xff]
    %v70 = vld [vmem:[#allocation5 + $0x70] sm:$0xff]
    %v71 = vld [vmem:[#allocation5 + $0x78] sm:$0xff]
    %72 = vmatprep.subr.mxu0 0.0
    %73 = vmatpush1.msra.mxu0 %v56
    %74 = vmatprep.subr.mxu0 0.0
    %75 = vmatpush1.msra.mxu0 %v57
    %76 = vmatprep.subr.mxu0 0.0
    %77 = vmatpush1.msra.mxu0 %v58
    %78 = vmatprep.subr.mxu0 0.0
    %79 = vmatpush1.msra.mxu0 %v59
    %80 = vmatprep.subr.mxu0 0.0
    %81 = vmatpush1.msra.mxu0 %v60
    %82 = vmatprep.subr.mxu0 0.0
    %83 = vmatpush1.msra.mxu0 %v61
    %84 = vmatprep.subr.mxu0 0.0
    %85 = vmatpush1.msra.mxu0 %v62
    %86 = vmatprep.subr.mxu0 0.0
    %87 = vmatpush1.msra.mxu0 %v63
    %88 = vmatprep.subr.mxu0 0.0
    %89 = vmatpush1.msra.mxu0 %v64
    %90 = vmatprep.subr.mxu0 0.0
    %91 = vmatpush1.msra.mxu0 %v65
    %92 = vmatprep.subr.mxu0 0.0
    %93 = vmatpush1.msra.mxu0 %v66
    %94 = vmatprep.subr.mxu0 0.0
    %95 = vmatpush1.msra.mxu0 %v67
    %96 = vmatprep.subr.mxu0 0.0
    %97 = vmatpush1.msra.mxu0 %v68
    %98 = vmatprep.subr.mxu0 0.0
    %99 = vmatpush1.msra.mxu0 %v69
    %100 = vmatprep.subr.mxu0 0.0
    %101 = vmatpush1.msra.mxu0 %v70
    %102 = vmatprep.subr.mxu0 0.0
    %103 = vmatpush1.msra.mxu0 %v71
    %104 = vmatprep.subr.mxu0 0.0
    %105 = vmatpush1.msra.mxu0 0.0
    %106 = vmatprep.subr.mxu0 0.0
    %107 = vmatpush1.msra.mxu0 0.0
    %108 = vmatprep.subr.mxu0 0.0
    %109 = vmatpush1.msra.mxu0 0.0
    %110 = vmatprep.subr.mxu0 0.0
    %111 = vmatpush1.msra.mxu0 0.0
    %112 = vmatprep.subr.mxu0 0.0
    %113 = vmatpush1.msra.mxu0 0.0
    %114 = vmatprep.subr.mxu0 0.0
    %115 = vmatpush1.msra.mxu0 0.0
    %116 = vmatprep.subr.mxu0 0.0
    %117 = vmatpush1.msra.mxu0 0.0
    %118 = vmatprep.subr.mxu0 0.0
    %119 = vmatpush1.msra.mxu0 0.0
    %120 = vmatprep.subr.mxu0 0.0
    %121 = vmatpush1.msra.mxu0 0.0
    %122 = vmatprep.subr.mxu0 0.0
    %123 = vmatpush1.msra.mxu0 0.0
    %124 = vmatprep.subr.mxu0 0.0
    %125 = vmatpush1.msra.mxu0 0.0
    %126 = vmatprep.subr.mxu0 0.0
    %127 = vmatpush1.msra.mxu0 0.0
    %128 = vmatprep.subr.mxu0 0.0
    %129 = vmatpush1.msra.mxu0 0.0
    %130 = vmatprep.subr.mxu0 0.0
    %131 = vmatpush1.msra.mxu0 0.0
    %132 = vmatprep.subr.mxu0 0.0
    %133 = vmatpush1.msra.mxu0 0.0
    %134 = vmatprep.subr.mxu0 0.0
    %135 = vmatpush1.msra.mxu0 0.0
    %136 = vmatprep.mubr.f32.mxu0 0.0
    %137 = vmatmul.mubr.f32.gmra.mrb[0].mxu0 %v40
    %v138 = vpop.f32.mrb[0].mxu0
    %v139 = vadd.f32 0.0, %v138
    %v140 = vpop.f32.mrb[0].mxu0
    %141 = vmatprep.mubr.f32.mxu0 0.0
    %142 = vmatmul.mubr.f32.gmra.mrb[0].mxu0 %v41
    %v143 = vpop.f32.mrb[0].mxu0
    %v144 = vadd.f32 0.0, %v143
    %v145 = vpop.f32.mrb[0].mxu0
    %146 = vmatprep.mubr.f32.mxu0 0.0
    %147 = vmatmul.mubr.f32.gmra.mrb[0].mxu0 %v42
    %v148 = vpop.f32.mrb[0].mxu0
    %v149 = vadd.f32 0.0, %v148
    %v150 = vpop.f32.mrb[0].mxu0
    %151 = vmatprep.mubr.f32.mxu0 0.0
    %152 = vmatmul.mubr.f32.gmra.mrb[0].mxu0 %v43
    %v153 = vpop.f32.mrb[0].mxu0
    %v154 = vadd.f32 0.0, %v153
    %v155 = vpop.f32.mrb[0].mxu0
    %156 = vmatprep.mubr.f32.mxu0 0.0
    %157 = vmatmul.mubr.f32.gmra.mrb[0].mxu0 %v44
    %v158 = vpop.f32.mrb[0].mxu0
    %v159 = vadd.f32 0.0, %v158
    %v160 = vpop.f32.mrb[0].mxu0
    %161 = vmatprep.mubr.f32.mxu0 0.0
    %162 = vmatmul.mubr.f32.gmra.mrb[0].mxu0 %v45
    %v163 = vpop.f32.mrb[0].mxu0
    %v164 = vadd.f32 0.0, %v163
    %v165 = vpop.f32.mrb[0].mxu0
    %166 = vmatprep.mubr.f32.mxu0 0.0
    %167 = vmatmul.mubr.f32.gmra.mrb[0].mxu0 %v46
    %v168 = vpop.f32.mrb[0].mxu0
    %v169 = vadd.f32 0.0, %v168
    %v170 = vpop.f32.mrb[0].mxu0
    %171 = vmatprep.mubr.f32.mxu0 0.0
    %172 = vmatmul.mubr.f32.gmra.mrb[0].mxu0 %v47
    %v173 = vpop.f32.mrb[0].mxu0
    %v174 = vadd.f32 0.0, %v173
    %v175 = vpop.f32.mrb[0].mxu0
    %176 = vmatprep.mubr.f32.mxu0 0.0
    %177 = vmatmul.mubr.f32.gmra.mrb[0].mxu0 %v48
    %v178 = vpop.f32.mrb[0].mxu0
    %v179 = vadd.f32 0.0, %v178
    %v180 = vpop.f32.mrb[0].mxu0
    %181 = vmatprep.mubr.f32.mxu0 0.0
    %182 = vmatmul.mubr.f32.gmra.mrb[0].mxu0 %v49
    %v183 = vpop.f32.mrb[0].mxu0
    %v184 = vadd.f32 0.0, %v183
    %v185 = vpop.f32.mrb[0].mxu0
    %186 = vmatprep.mubr.f32.mxu0 0.0
    %187 = vmatmul.mubr.f32.gmra.mrb[0].mxu0 %v50
    %v188 = vpop.f32.mrb[0].mxu0
    %v189 = vadd.f32 0.0, %v188
    %v190 = vpop.f32.mrb[0].mxu0
    %191 = vmatprep.mubr.f32.mxu0 0.0
    %192 = vmatmul.mubr.f32.gmra.mrb[0].mxu0 %v51
    %v193 = vpop.f32.mrb[0].mxu0
    %v194 = vadd.f32 0.0, %v193
    %v195 = vpop.f32.mrb[0].mxu0
    %196 = vmatprep.mubr.f32.mxu0 0.0
    %197 = vmatmul.mubr.f32.gmra.mrb[0].mxu0 %v52
    %v198 = vpop.f32.mrb[0].mxu0
    %v199 = vadd.f32 0.0, %v198
    %v200 = vpop.f32.mrb[0].mxu0
    %201 = vmatprep.mubr.f32.mxu0 0.0
    %202 = vmatmul.mubr.f32.gmra.mrb[0].mxu0 %v53
    %v203 = vpop.f32.mrb[0].mxu0
    %v204 = vadd.f32 0.0, %v203
    %v205 = vpop.f32.mrb[0].mxu0
    %206 = vmatprep.mubr.f32.mxu0 0.0
    %207 = vmatmul.mubr.f32.gmra.mrb[0].mxu0 %v54
    %v208 = vpop.f32.mrb[0].mxu0
    %v209 = vadd.f32 0.0, %v208
    %v210 = vpop.f32.mrb[0].mxu0
    %211 = vmatprep.mubr.f32.mxu0 0.0
    %212 = vmatmul.mubr.f32.gmra.mrb[0].mxu0 %v55
    %v213 = vpop.f32.mrb[0].mxu0
    %v214 = vadd.f32 0.0, %v213
    %v215 = vpop.f32.mrb[0].mxu0
    %216 = vdwg.mxu0
    %v217 = vadd.f32 %v56, %v139
    %v218 = vadd.f32 %v57, %v144
    %v219 = vadd.f32 %v58, %v149
    %v220 = vadd.f32 %v59, %v154
    %v221 = vadd.f32 %v60, %v159
    %v222 = vadd.f32 %v61, %v164
    %v223 = vadd.f32 %v62, %v169
    %v224 = vadd.f32 %v63, %v174
    %v225 = vadd.f32 %v64, %v179
    %v226 = vadd.f32 %v65, %v184
    %v227 = vadd.f32 %v66, %v189
    %v228 = vadd.f32 %v67, %v194
    %v229 = vadd.f32 %v68, %v199
    %v230 = vadd.f32 %v69, %v204
    %v231 = vadd.f32 %v70, %v209
    %v232 = vadd.f32 %v71, %v214
    %233 = vmatprep.subr.mxu0 0.0
    %234 = vmatpush1.msra.mxu0 %v139
    %235 = vmatprep.subr.mxu0 0.0
    %236 = vmatpush1.msra.mxu0 %v144
    %237 = vmatprep.subr.mxu0 0.0
    %238 = vmatpush1.msra.mxu0 %v149
    %239 = vmatprep.subr.mxu0 0.0
    %240 = vmatpush1.msra.mxu0 %v154
    %241 = vmatprep.subr.mxu0 0.0
    %242 = vmatpush1.msra.mxu0 %v159
    %243 = vmatprep.subr.mxu0 0.0
    %244 = vmatpush1.msra.mxu0 %v164
    %245 = vmatprep.subr.mxu0 0.0
    %246 = vmatpush1.msra.mxu0 %v169
    %247 = vmatprep.subr.mxu0 0.0
    %248 = vmatpush1.msra.mxu0 %v174
    %249 = vmatprep.subr.mxu0 0.0
    %250 = vmatpush1.msra.mxu0 %v179
    %251 = vmatprep.subr.mxu0 0.0
    %252 = vmatpush1.msra.mxu0 %v184
    %253 = vmatprep.subr.mxu0 0.0
    %254 = vmatpush1.msra.mxu0 %v189
    %255 = vmatprep.subr.mxu0 0.0
    %256 = vmatpush1.msra.mxu0 %v194
    %257 = vmatprep.subr.mxu0 0.0
    %258 = vmatpush1.msra.mxu0 %v199
    %259 = vmatprep.subr.mxu0 0.0
    %260 = vmatpush1.msra.mxu0 %v204
    %261 = vmatprep.subr.mxu0 0.0
    %262 = vmatpush1.msra.mxu0 %v209
    %263 = vmatprep.subr.mxu0 0.0
    %264 = vmatpush1.msra.mxu0 %v214
    %265 = vmatprep.subr.mxu0 0.0
    %266 = vmatpush1.msra.mxu0 0.0
    %267 = vmatprep.subr.mxu0 0.0
    %268 = vmatpush1.msra.mxu0 0.0
    %269 = vmatprep.subr.mxu0 0.0
    %270 = vmatpush1.msra.mxu0 0.0
    %271 = vmatprep.subr.mxu0 0.0
    %272 = vmatpush1.msra.mxu0 0.0
    %273 = vmatprep.subr.mxu0 0.0
    %274 = vmatpush1.msra.mxu0 0.0
    %275 = vmatprep.subr.mxu0 0.0
    %276 = vmatpush1.msra.mxu0 0.0
    %277 = vmatprep.subr.mxu0 0.0
    %278 = vmatpush1.msra.mxu0 0.0
    %279 = vmatprep.subr.mxu0 0.0
    %280 = vmatpush1.msra.mxu0 0.0
    %281 = vmatprep.subr.mxu0 0.0
    %282 = vmatpush1.msra.mxu0 0.0
    %283 = vmatprep.subr.mxu0 0.0
    %284 = vmatpush1.msra.mxu0 0.0
    %285 = vmatprep.subr.mxu0 0.0
    %286 = vmatpush1.msra.mxu0 0.0
    %287 = vmatprep.subr.mxu0 0.0
    %288 = vmatpush1.msra.mxu0 0.0
    %289 = vmatprep.subr.mxu0 0.0
    %290 = vmatpush1.msra.mxu0 0.0
    %291 = vmatprep.subr.mxu0 0.0
    %292 = vmatpush1.msra.mxu0 0.0
    %293 = vmatprep.subr.mxu0 0.0
    %294 = vmatpush1.msra.mxu0 0.0
    %295 = vmatprep.subr.mxu0 0.0
    %296 = vmatpush1.msra.mxu0 0.0
    %297 = vmatprep.mubr.f32.mxu0 0.0
    %298 = vmatmul.mubr.f32.gmra.mrb[0].mxu0 %v40
    %v299 = vpop.f32.mrb[0].mxu0
    %v300 = vadd.f32 0.0, %v299
    %v301 = vpop.f32.mrb[0].mxu0
    %302 = vmatprep.mubr.f32.mxu0 0.0
    %303 = vmatmul.mubr.f32.gmra.mrb[0].mxu0 %v41
    %v304 = vpop.f32.mrb[0].mxu0
    %v305 = vadd.f32 0.0, %v304
    %v306 = vpop.f32.mrb[0].mxu0
    %307 = vmatprep.mubr.f32.mxu0 0.0
    %308 = vmatmul.mubr.f32.gmra.mrb[0].mxu0 %v42
    %v309 = vpop.f32.mrb[0].mxu0
    %v310 = vadd.f32 0.0, %v309
    %v311 = vpop.f32.mrb[0].mxu0
    %312 = vmatprep.mubr.f32.mxu0 0.0
    %313 = vmatmul.mubr.f32.gmra.mrb[0].mxu0 %v43
    %v314 = vpop.f32.mrb[0].mxu0
    %v315 = vadd.f32 0.0, %v314
    %v316 = vpop.f32.mrb[0].mxu0
    %317 = vmatprep.mubr.f32.mxu0 0.0
    %318 = vmatmul.mubr.f32.gmra.mrb[0].mxu0 %v44
    %v319 = vpop.f32.mrb[0].mxu0
    %v320 = vadd.f32 0.0, %v319
    %v321 = vpop.f32.mrb[0].mxu0
    %322 = vmatprep.mubr.f32.mxu0 0.0
    %323 = vmatmul.mubr.f32.gmra.mrb[0].mxu0 %v45
    %v324 = vpop.f32.mrb[0].mxu0
    %v325 = vadd.f32 0.0, %v324
    %v326 = vpop.f32.mrb[0].mxu0
    %327 = vmatprep.mubr.f32.mxu0 0.0
    %328 = vmatmul.mubr.f32.gmra.mrb[0].mxu0 %v46
    %v329 = vpop.f32.mrb[0].mxu0
    %v330 = vadd.f32 0.0, %v329
    %v331 = vpop.f32.mrb[0].mxu0
    %332 = vmatprep.mubr.f32.mxu0 0.0
    %333 = vmatmul.mubr.f32.gmra.mrb[0].mxu0 %v47
    %v334 = vpop.f32.mrb[0].mxu0
    %v335 = vadd.f32 0.0, %v334
    %v336 = vpop.f32.mrb[0].mxu0
    %337 = vmatprep.mubr.f32.mxu0 0.0
    %338 = vmatmul.mubr.f32.gmra.mrb[0].mxu0 %v48
    %v339 = vpop.f32.mrb[0].mxu0
    %v340 = vadd.f32 0.0, %v339
    %v341 = vpop.f32.mrb[0].mxu0
    %342 = vmatprep.mubr.f32.mxu0 0.0
    %343 = vmatmul.mubr.f32.gmra.mrb[0].mxu0 %v49
    %v344 = vpop.f32.mrb[0].mxu0
    %v345 = vadd.f32 0.0, %v344
    %v346 = vpop.f32.mrb[0].mxu0
    %347 = vmatprep.mubr.f32.mxu0 0.0
    %348 = vmatmul.mubr.f32.gmra.mrb[0].mxu0 %v50
    %v349 = vpop.f32.mrb[0].mxu0
    %v350 = vadd.f32 0.0, %v349
    %v351 = vpop.f32.mrb[0].mxu0
    %352 = vmatprep.mubr.f32.mxu0 0.0
    %353 = vmatmul.mubr.f32.gmra.mrb[0].mxu0 %v51
    %v354 = vpop.f32.mrb[0].mxu0
    %v355 = vadd.f32 0.0, %v354
    %v356 = vpop.f32.mrb[0].mxu0
    %357 = vmatprep.mubr.f32.mxu0 0.0
    %358 = vmatmul.mubr.f32.gmra.mrb[0].mxu0 %v52
    %v359 = vpop.f32.mrb[0].mxu0
    %v360 = vadd.f32 0.0, %v359
    %v361 = vpop.f32.mrb[0].mxu0
    %362 = vmatprep.mubr.f32.mxu0 0.0
    %363 = vmatmul.mubr.f32.gmra.mrb[0].mxu0 %v53
    %v364 = vpop.f32.mrb[0].mxu0
    %v365 = vadd.f32 0.0, %v364
    %v366 = vpop.f32.mrb[0].mxu0
    %367 = vmatprep.mubr.f32.mxu0 0.0
    %368 = vmatmul.mubr.f32.gmra.mrb[0].mxu0 %v54
    %v369 = vpop.f32.mrb[0].mxu0
    %v370 = vadd.f32 0.0, %v369
    %v371 = vpop.f32.mrb[0].mxu0
    %372 = vmatprep.mubr.f32.mxu0 0.0
    %373 = vmatmul.mubr.f32.gmra.mrb[0].mxu0 %v55
    %v374 = vpop.f32.mrb[0].mxu0
    %v375 = vadd.f32 0.0, %v374
    %v376 = vpop.f32.mrb[0].mxu0
    %377 = vdwg.mxu0
    %v378 = vadd.f32 %v217, %v300
    %v379 = vadd.f32 %v218, %v305
    %v380 = vadd.f32 %v219, %v310
    %v381 = vadd.f32 %v220, %v315
    %v382 = vadd.f32 %v221, %v320
    %v383 = vadd.f32 %v222, %v325
    %v384 = vadd.f32 %v223, %v330
    %v385 = vadd.f32 %v224, %v335
    %v386 = vadd.f32 %v225, %v340
    %v387 = vadd.f32 %v226, %v345
    %v388 = vadd.f32 %v227, %v350
    %v389 = vadd.f32 %v228, %v355
    %v390 = vadd.f32 %v229, %v360
    %v391 = vadd.f32 %v230, %v365
    %v392 = vadd.f32 %v231, %v370
    %v393 = vadd.f32 %v232, %v375
    %394 = vmatprep.subr.mxu0 0.0
    %395 = vmatpush1.msra.mxu0 %v300
    %396 = vmatprep.subr.mxu0 0.0
    %397 = vmatpush1.msra.mxu0 %v305
    %398 = vmatprep.subr.mxu0 0.0
    %399 = vmatpush1.msra.mxu0 %v310
    %400 = vmatprep.subr.mxu0 0.0
    %401 = vmatpush1.msra.mxu0 %v315
    %402 = vmatprep.subr.mxu0 0.0
    %403 = vmatpush1.msra.mxu0 %v320
    %404 = vmatprep.subr.mxu0 0.0
    %405 = vmatpush1.msra.mxu0 %v325
    %406 = vmatprep.subr.mxu0 0.0
    %407 = vmatpush1.msra.mxu0 %v330
    %408 = vmatprep.subr.mxu0 0.0
    %409 = vmatpush1.msra.mxu0 %v335
    %410 = vmatprep.subr.mxu0 0.0
    %411 = vmatpush1.msra.mxu0 %v340
    %412 = vmatprep.subr.mxu0 0.0
    %413 = vmatpush1.msra.mxu0 %v345
    %414 = vmatprep.subr.mxu0 0.0
    %415 = vmatpush1.msra.mxu0 %v350
    %416 = vmatprep.subr.mxu0 0.0
    %417 = vmatpush1.msra.mxu0 %v355
    %418 = vmatprep.subr.mxu0 0.0
    %419 = vmatpush1.msra.mxu0 %v360
    %420 = vmatprep.subr.mxu0 0.0
    %421 = vmatpush1.msra.mxu0 %v365
    %422 = vmatprep.subr.mxu0 0.0
    %423 = vmatpush1.msra.mxu0 %v370
    %424 = vmatprep.subr.mxu0 0.0
    %425 = vmatpush1.msra.mxu0 %v375
    %426 = vmatprep.subr.mxu0 0.0
    %427 = vmatpush1.msra.mxu0 0.0
    %428 = vmatprep.subr.mxu0 0.0
    %429 = vmatpush1.msra.mxu0 0.0
    %430 = vmatprep.subr.mxu0 0.0
    %431 = vmatpush1.msra.mxu0 0.0
    %432 = vmatprep.subr.mxu0 0.0
    %433 = vmatpush1.msra.mxu0 0.0
    %434 = vmatprep.subr.mxu0 0.0
    %435 = vmatpush1.msra.mxu0 0.0
    %436 = vmatprep.subr.mxu0 0.0
    %437 = vmatpush1.msra.mxu0 0.0
    %438 = vmatprep.subr.mxu0 0.0
    %439 = vmatpush1.msra.mxu0 0.0
    %440 = vmatprep.subr.mxu0 0.0
    %441 = vmatpush1.msra.mxu0 0.0
    %442 = vmatprep.subr.mxu0 0.0
    %443 = vmatpush1.msra.mxu0 0.0
    %444 = vmatprep.subr.mxu0 0.0
    %445 = vmatpush1.msra.mxu0 0.0
    %446 = vmatprep.subr.mxu0 0.0
    %447 = vmatpush1.msra.mxu0 0.0
    %448 = vmatprep.subr.mxu0 0.0
    %449 = vmatpush1.msra.mxu0 0.0
    %450 = vmatprep.subr.mxu0 0.0
    %451 = vmatpush1.msra.mxu0 0.0
    %452 = vmatprep.subr.mxu0 0.0
    %453 = vmatpush1.msra.mxu0 0.0
    %454 = vmatprep.subr.mxu0 0.0
    %455 = vmatpush1.msra.mxu0 0.0
    %456 = vmatprep.subr.mxu0 0.0
    %457 = vmatpush1.msra.mxu0 0.0
    %458 = vmatprep.mubr.f32.mxu0 0.0
    %459 = vmatmul.mubr.f32.gmra.mrb[0].mxu0 %v40
    %v460 = vpop.f32.mrb[0].mxu0
    %v461 = vadd.f32 0.0, %v460
    %v462 = vpop.f32.mrb[0].mxu0
    %463 = vmatprep.mubr.f32.mxu0 0.0
    %464 = vmatmul.mubr.f32.gmra.mrb[0].mxu0 %v41
    %v465 = vpop.f32.mrb[0].mxu0
    %v466 = vadd.f32 0.0, %v465
    %v467 = vpop.f32.mrb[0].mxu0
    %468 = vmatprep.mubr.f32.mxu0 0.0
    %469 = vmatmul.mubr.f32.gmra.mrb[0].mxu0 %v42
    %v470 = vpop.f32.mrb[0].mxu0
    %v471 = vadd.f32 0.0, %v470
    %v472 = vpop.f32.mrb[0].mxu0
    %473 = vmatprep.mubr.f32.mxu0 0.0
    %474 = vmatmul.mubr.f32.gmra.mrb[0].mxu0 %v43
    %v475 = vpop.f32.mrb[0].mxu0
    %v476 = vadd.f32 0.0, %v475
    %v477 = vpop.f32.mrb[0].mxu0
    %478 = vmatprep.mubr.f32.mxu0 0.0
    %479 = vmatmul.mubr.f32.gmra.mrb[0].mxu0 %v44
    %v480 = vpop.f32.mrb[0].mxu0
    %v481 = vadd.f32 0.0, %v480
    %v482 = vpop.f32.mrb[0].mxu0
    %483 = vmatprep.mubr.f32.mxu0 0.0
    %484 = vmatmul.mubr.f32.gmra.mrb[0].mxu0 %v45
    %v485 = vpop.f32.mrb[0].mxu0
    %v486 = vadd.f32 0.0, %v485
    %v487 = vpop.f32.mrb[0].mxu0
    %488 = vmatprep.mubr.f32.mxu0 0.0
    %489 = vmatmul.mubr.f32.gmra.mrb[0].mxu0 %v46
    %v490 = vpop.f32.mrb[0].mxu0
    %v491 = vadd.f32 0.0, %v490
    %v492 = vpop.f32.mrb[0].mxu0
    %493 = vmatprep.mubr.f32.mxu0 0.0
    %494 = vmatmul.mubr.f32.gmra.mrb[0].mxu0 %v47
    %v495 = vpop.f32.mrb[0].mxu0
    %v496 = vadd.f32 0.0, %v495
    %v497 = vpop.f32.mrb[0].mxu0
    %498 = vmatprep.mubr.f32.mxu0 0.0
    %499 = vmatmul.mubr.f32.gmra.mrb[0].mxu0 %v48
    %v500 = vpop.f32.mrb[0].mxu0
    %v501 = vadd.f32 0.0, %v500
    %v502 = vpop.f32.mrb[0].mxu0
    %503 = vmatprep.mubr.f32.mxu0 0.0
    %504 = vmatmul.mubr.f32.gmra.mrb[0].mxu0 %v49
    %v505 = vpop.f32.mrb[0].mxu0
    %v506 = vadd.f32 0.0, %v505
    %v507 = vpop.f32.mrb[0].mxu0
    %508 = vmatprep.mubr.f32.mxu0 0.0
    %509 = vmatmul.mubr.f32.gmra.mrb[0].mxu0 %v50
    %v510 = vpop.f32.mrb[0].mxu0
    %v511 = vadd.f32 0.0, %v510
    %v512 = vpop.f32.mrb[0].mxu0
    %513 = vmatprep.mubr.f32.mxu0 0.0
    %514 = vmatmul.mubr.f32.gmra.mrb[0].mxu0 %v51
    %v515 = vpop.f32.mrb[0].mxu0
    %v516 = vadd.f32 0.0, %v515
    %v517 = vpop.f32.mrb[0].mxu0
    %518 = vmatprep.mubr.f32.mxu0 0.0
    %519 = vmatmul.mubr.f32.gmra.mrb[0].mxu0 %v52
    %v520 = vpop.f32.mrb[0].mxu0
    %v521 = vadd.f32 0.0, %v520
    %v522 = vpop.f32.mrb[0].mxu0
    %523 = vmatprep.mubr.f32.mxu0 0.0
    %524 = vmatmul.mubr.f32.gmra.mrb[0].mxu0 %v53
    %v525 = vpop.f32.mrb[0].mxu0
    %v526 = vadd.f32 0.0, %v525
    %v527 = vpop.f32.mrb[0].mxu0
    %528 = vmatprep.mubr.f32.mxu0 0.0
    %529 = vmatmul.mubr.f32.gmra.mrb[0].mxu0 %v54
    %v530 = vpop.f32.mrb[0].mxu0
    %v531 = vadd.f32 0.0, %v530
    %v532 = vpop.f32.mrb[0].mxu0
    %533 = vmatprep.mubr.f32.mxu0 0.0
    %534 = vmatmul.mubr.f32.gmra.mrb[0].mxu0 %v55
    %v535 = vpop.f32.mrb[0].mxu0
    %v536 = vadd.f32 0.0, %v535
    %v537 = vpop.f32.mrb[0].mxu0
    %538 = vdwg.mxu0
    %v539 = vadd.f32 %v378, %v461
    %v540 = vadd.f32 %v379, %v466
    %v541 = vadd.f32 %v380, %v471
    %v542 = vadd.f32 %v381, %v476
    %v543 = vadd.f32 %v382, %v481
    %v544 = vadd.f32 %v383, %v486
    %v545 = vadd.f32 %v384, %v491
    %v546 = vadd.f32 %v385, %v496
    %v547 = vadd.f32 %v386, %v501
    %v548 = vadd.f32 %v387, %v506
    %v549 = vadd.f32 %v388, %v511
    %v550 = vadd.f32 %v389, %v516
    %v551 = vadd.f32 %v390, %v521
    %v552 = vadd.f32 %v391, %v526
    %v553 = vadd.f32 %v392, %v531
    %v554 = vadd.f32 %v393, %v536
    %555 = vst [vmem:[#allocation7] sm:$0xff] %v539
    %556 = vst [vmem:[#allocation7 + $0x8] sm:$0xff] %v540
    %557 = vst [vmem:[#allocation7 + $0x10] sm:$0xff] %v541
    %558 = vst [vmem:[#allocation7 + $0x18] sm:$0xff] %v542
    %559 = vst [vmem:[#allocation7 + $0x20] sm:$0xff] %v543
    %560 = vst [vmem:[#allocation7 + $0x28] sm:$0xff] %v544
    %561 = vst [vmem:[#allocation7 + $0x30] sm:$0xff] %v545
    %562 = vst [vmem:[#allocation7 + $0x38] sm:$0xff] %v546
    %563 = vst [vmem:[#allocation7 + $0x40] sm:$0xff] %v547
    %564 = vst [vmem:[#allocation7 + $0x48] sm:$0xff] %v548
    %565 = vst [vmem:[#allocation7 + $0x50] sm:$0xff] %v549
    %566 = vst [vmem:[#allocation7 + $0x58] sm:$0xff] %v550
    %567 = vst [vmem:[#allocation7 + $0x60] sm:$0xff] %v551
    %568 = vst [vmem:[#allocation7 + $0x68] sm:$0xff] %v552
    %569 = vst [vmem:[#allocation7 + $0x70] sm:$0xff] %v553
    %570 = vst [vmem:[#allocation7 + $0x78] sm:$0xff] %v554
    // Predicated region
    $region18: #{tpu_custom_call.1} parent=1 // pred_check
      _
    $region19: #{tpu_custom_call.1} parent=1 // pred_check_branch
      %572 = sbr.rel (0) target = $region21
    $region20: #{tpu_custom_call.1} parent=1 // pred_region
      %s574 = ssub.s32 2048, 2048
      %575 = vsyncadd [#allocation4], %s574
      %s576 = sshll.u32 [#allocation7], 4
      %s577 = int_to_ptr.vmem [resolvable:$true] %s576
      %582 = dma.vmem_to_hbm [thread:$0]  %s577, 2048, %s2, [#allocation4], 128, 128, 8
    $region21: #{tpu_custom_call.1} parent=1 // pred_fallthru
      _
    // Predicated region
    $region22: #{tpu_custom_call.1} parent=1 // pred_check
      _
    $region23: #{tpu_custom_call.1} parent=1 // pred_check_branch
      %584 = sbr.rel (0) target = $region25
    $region24: #{tpu_custom_call.1} parent=1 // pred_region
      %585 = dma.done [#allocation4], 2048
    $region25: #{tpu_custom_call.1} parent=1 // pred_fallthru
      _
    %586 = vsyncpa [#allocation3], 1
    %587 = vsyncpa [#allocation6], 1
    %588 = vsyncpa [#allocation4], 1

</llo_original>
